<compile_context>
chip_gen: v5e
topology: v5e:2x2
jax: 0.10.0
libtpu: 0.0.40
codegen_flags: <defaults>
</compile_context>

<pallas_src>
import jax
import jax.numpy as jnp
from jax.experimental import pallas as pl
from jax.experimental.pallas import tpu as pltpu


def _displacement_head_kernel(x_ref, w_ref, b_ref, o_ref):
    # x_ref: (T, D) input dtype | w_ref: (1, D) f32 | b_ref: (1,) f32 in SMEM
    # o_ref: (1, T) f32 (lane-dense output slab)
    x = x_ref[...].astype(jnp.float32)            # upcast (bf16 inputs) -> f32 accumulate
    w = w_ref[...]                                # (1, D) broadcasts over (T, D)
    y = jnp.sum(x * w, axis=-1)                   # (T,): VPU multiply + XLU lane reduce
    o_ref[0, :] = (y + b_ref[0]).astype(o_ref.dtype)


def _pick_tile_rows(n_rows, row_bytes_padded):
    """Row-tile size: ~4 MiB per (double-buffered) x tile, multiple of 128,
    clamped to [128, 2048]; collapse to a single full-array block when small."""
    budget = 4 << 20
    t = max(1, budget // max(1, row_bytes_padded))
    t = min(2048, t)
    t = max(128, (t // 128) * 128)
    if n_rows <= t:
        # Single tile covering all rows (8-aligned for sublane layout).
        return max(8, ((n_rows + 7) // 8) * 8)
    return t


def temporal_displacement_head(x, weight, bias):
    """x: (B, S, D).  weight: (1, D) (nn.Linear(D, 1).weight).  bias: (1,).
    Returns (B, S) float32 (matches the fp32 PyTorch head)."""
    B, S, D = x.shape
    n_rows = B * S
    x_flat = x.reshape(n_rows, D)                     # free view
    w2d = weight.reshape(1, D).astype(jnp.float32)
    b1d = bias.reshape(1).astype(jnp.float32)

    itemsize = jnp.dtype(x.dtype).itemsize
    d_lanes = ((D + 127) // 128) * 128                # lane-padded row width in VMEM
    T = _pick_tile_rows(n_rows, d_lanes * itemsize)
    ntiles = pl.cdiv(n_rows, T)
    n_pad = ntiles * T                                # padded output columns (sliced off below)

    # Explicit scoped-VMEM budget: 2 double-buffered x tiles + output blocks +
    # resident weight + headroom.  Stays well under v5e's 16 MiB default and
    # v7x's 64 MiB physical VMEM.
    needed = 2 * T * d_lanes * itemsize + 2 * T * 4 + 2 * d_lanes * 4
    vmem_limit = int(min(32 << 20, max(16 << 20, needed + (4 << 20))))

    cost = pl.CostEstimate(
        flops=2 * n_rows * D,
        transcendentals=0,
        bytes_accessed=n_rows * D * itemsize + n_rows * 4 + D * 4 + 4,
    )

    out = pl.pallas_call(
        _displacement_head_kernel,
        out_shape=jax.ShapeDtypeStruct((1, n_pad), jnp.float32),
        grid_spec=pltpu.PrefetchScalarGridSpec(
            num_scalar_prefetch=0,
            grid=(ntiles,),
            in_specs=[
                pl.BlockSpec((T, D), lambda i: (i, 0)),                   # x row tile
                pl.BlockSpec((1, D), lambda i: (0, 0)),                   # weight (resident)
                pl.BlockSpec(memory_space=pltpu.MemorySpace.SMEM),        # bias scalar
            ],
            out_specs=pl.BlockSpec((1, T), lambda i: (0, i)),             # lane-dense output
        ),
        compiler_params=pltpu.CompilerParams(
            dimension_semantics=("parallel",),       # v7x: shard row tiles across both TCs
            vmem_limit_bytes=vmem_limit,
        ),
        cost_estimate=cost,
    )(x_flat, w2d, b1d)

    return out[0, :n_rows].reshape(B, S)


def _reference(x, weight, bias):
    """Plain-JAX reference matching nn.Linear(in_dim, 1)(x).squeeze(-1) in f32."""
    y = x.astype(jnp.float32) @ weight.astype(jnp.float32).T + bias.astype(jnp.float32)
    return y[..., 0]


if __name__ == "__main__":
    B, S, D = 2, 8, 32

    key = jax.random.PRNGKey(0)
    kx, kw, kb = jax.random.split(key, 3)

    x = jax.random.normal(kx, (B, S, D), dtype=jnp.float32)
    # nn.Linear(in_dim=D, out_features=1): weight (1, D), bias (1,)
    bound = 1.0 / (D ** 0.5)
    weight = jax.random.uniform(kw, (1, D), jnp.float32, -bound, bound)
    bias = jax.random.uniform(kb, (1,), jnp.float32, -bound, bound)

    out = temporal_displacement_head(x, weight, bias)
    out = jax.block_until_ready(out)

    ref = _reference(x, weight, bias)
    assert out.shape == (B, S), f"bad shape {out.shape}"
    assert jnp.allclose(out, ref, atol=1e-5, rtol=1e-5), "mismatch vs reference"

    print("KERNEL_OK")
</pallas_src>

<mosaic_0001>
module attributes {stable_mosaic.version = 11 : i64} {
  func.func @_displacement_head_kernel(%arg0: i32, %arg1: memref<16x32xf32, #tpu.memory_space<vmem>>, %arg2: memref<1x32xf32, #tpu.memory_space<vmem>>, %arg3: memref<1xf32, #tpu.memory_space<smem>>, %arg4: memref<1x16xf32, #tpu.memory_space<vmem>>) attributes {dimension_semantics = [#tpu.dimension_semantics<parallel>], iteration_bounds = array<i64: 1>, scalar_prefetch = 0 : i64, scratch_operands = 0 : i64, tpu.core_type = #tpu.core_type<tc>, window_params = [{transform_indices = @transform_0, window_bounds = array<i64: 16, 32>}, {pipeline_mode = #tpu.pipeline_mode<synchronous>, transform_indices = @transform_1, window_bounds = array<i64: 1, 32>}, {transform_indices = @transform_2, window_bounds = array<i64: 1>}, {transform_indices = @transform_3, window_bounds = array<i64: 1, 16>}]} {
    %c0 = arith.constant 0 : index
    %c0_0 = arith.constant 0 : index
    %0 = vector.load %arg1[%c0, %c0_0] : memref<16x32xf32, #tpu.memory_space<vmem>>, vector<16x32xf32>
    %c0_1 = arith.constant 0 : index
    %c0_2 = arith.constant 0 : index
    %1 = vector.load %arg2[%c0_1, %c0_2] : memref<1x32xf32, #tpu.memory_space<vmem>>, vector<1x32xf32>
    %2 = vector.broadcast %1 : vector<1x32xf32> to vector<16x32xf32>
    %3 = arith.mulf %0, %2 : vector<16x32xf32>
    %cst = arith.constant dense<0.000000e+00> : vector<16xf32>
    %4 = vector.multi_reduction <add>, %3, %cst [1] : vector<16x32xf32> to vector<16xf32>
    %c0_3 = arith.constant 0 : index
    %5 = memref.load %arg3[%c0_3] : memref<1xf32, #tpu.memory_space<smem>>
    %6 = vector.broadcast %5 : f32 to vector<16xf32>
    %7 = arith.addf %4, %6 : vector<16xf32>
    %c0_4 = arith.constant 0 : index
    %c0_5 = arith.constant 0 : index
    %8 = vector.load %arg4[%c0_4, %c0_5] : memref<1x16xf32, #tpu.memory_space<vmem>>, vector<1x16xf32>
    %9 = vector.shape_cast %8 : vector<1x16xf32> to vector<16xf32>
    %10 = vector.shape_cast %7 : vector<16xf32> to vector<1x16xf32>
    tpu.vector_store %arg4[%c0_4, %c0_5], %10 {strides = array<i32>} : memref<1x16xf32, #tpu.memory_space<vmem>>, vector<1x16xf32>,
    return
  }
  func.func @transform_0(%arg0: i32) -> (i32, i32) {
    %c0_i32 = arith.constant 0 : i32
    %c0_i32_0 = arith.constant 0 : i32
    return %arg0, %c0_i32 : i32, i32
  }
  func.func @transform_1(%arg0: i32) -> (i32, i32) {
    %c0_i32 = arith.constant 0 : i32
    %c0_i32_0 = arith.constant 0 : i32
    %c0_i32_1 = arith.constant 0 : i32
    return %c0_i32, %c0_i32_0 : i32, i32
  }
  func.func @transform_2(%arg0: i32) -> i32 {
    %c0_i32 = arith.constant 0 : i32
    %c0_i32_0 = arith.constant 0 : i32
    return %c0_i32 : i32
  }
  func.func @transform_3(%arg0: i32) -> (i32, i32) {
    %c0_i32 = arith.constant 0 : i32
    %c0_i32_0 = arith.constant 0 : i32
    return %c0_i32, %arg0 : i32, i32
  }
}

</mosaic_0001>

<llo_original>
// kernel: tpu_custom_call.1
$region0: #{tpu_custom_call.1}
  #allocation0 [shape = 'u32[]', space=smem, size = 0x4, offset = 0x4, fixed_abs, tag = 'smem constant byte address 0x4 - core index']
  #allocation1 [shape = 'u32[72,128]{1,0:T(1,128)}', space=vmem, size = 0x9000, scoped, tag = 'internal scratch']
  #allocation2 [shape = 'f32[1]{0:T(128)S(6)}', space=smem, size = 0x200, scoped, tag = 'scoped memory for tpu_custom_call.1']
  %s0 = inlined_call_operand.hbm [shape: f32[16,32], index: 0, kind: input, shape index: {}]
  %s1 = inlined_call_operand.vmem [shape: f32[1,32], index: 1, kind: input, shape index: {}]
  %s2 = inlined_call_operand.<no memory space> [shape: f32[1], index: 2, kind: input, shape index: {}]
  %s3 = inlined_call_operand.hbm [shape: f32[1,16], index: 3, kind: output, shape index: {}]
  %s4 = sld [smem:[#allocation0]]
  $region26: #{tpu_custom_call.1} parent=0
    _
  %s6 = ssub.s32 1, %s4
  %s7 = scalar_select 0, %s6, %s4
  %8 = sst [smem:[#allocation2]] %s2
  $region1: #{tpu_custom_call.1} parent=0
    #allocation3 [shape = 'u8[8192]{0}', space=vmem, size = 0x2000, scoped, tag = 'input window, operand 0, single buffered']
    #allocation4 [shape = 's32[1]{0}', space=sflag, size = 0x4, scoped, tag = 'scoped memory for tpu_custom_call.1']
    #allocation5 [shape = 's32[1]{0}', space=sflag, size = 0x4, scoped, tag = 'scoped memory for tpu_custom_call.1']
    #allocation6 [shape = 'u8[512]{0}', space=vmem, size = 0x400, scoped, tag = 'output window, operand 0, single buffered']
    %9 = vsyncpa [#allocation4], 0
    %10 = vsyncpa [#allocation5], 0
    // Predicated region
    $region2: #{tpu_custom_call.1} parent=1 // pred_check
      _
    $region3: #{tpu_custom_call.1} parent=1 // pred_check_branch
      %12 = sbr.rel (0) target = $region5
    $region4: #{tpu_custom_call.1} parent=1 // pred_region
      %14 = vsyncadd [#allocation4], 0
      %s15 = sshll.u32 %s0, 4
      %s16 = int_to_ptr.hbm [resolvable:$true] %s15
      %s17 = sshll.u32 [#allocation3], 4
      %s18 = int_to_ptr.vmem [resolvable:$true] %s17
      %23 = dma.hbm_to_vmem [thread:$0]  %s16, 256, %s18, [#allocation4], 128, 128, 8
    $region5: #{tpu_custom_call.1} parent=1 // pred_fallthru
      _
    // Predicated region
    $region6: #{tpu_custom_call.1} parent=1 // pred_check
      _
    $region7: #{tpu_custom_call.1} parent=1 // pred_check_branch
      %25 = sbr.rel (0) target = $region9
    $region8: #{tpu_custom_call.1} parent=1 // pred_region
      _
    $region9: #{tpu_custom_call.1} parent=1 // pred_fallthru
      _
    // Predicated region
    $region10: #{tpu_custom_call.1} parent=1 // pred_check
      _
    $region11: #{tpu_custom_call.1} parent=1 // pred_check_branch
      %27 = sbr.rel (0) target = $region13
    $region12: #{tpu_custom_call.1} parent=1 // pred_region
      _
    $region13: #{tpu_custom_call.1} parent=1 // pred_fallthru
      _
    // Predicated region
    $region14: #{tpu_custom_call.1} parent=1 // pred_check
      _
    $region15: #{tpu_custom_call.1} parent=1 // pred_check_branch
      %29 = sbr.rel (0) target = $region17
    $region16: #{tpu_custom_call.1} parent=1 // pred_region
      %31 = dma.done [#allocation4], 256
    $region17: #{tpu_custom_call.1} parent=1 // pred_fallthru
      _
    %v32 = vld [vmem:[#allocation3] sm:$0xff]
    %v33 = vld [vmem:[#allocation3 + $0x8] sm:$0xff]
    %v34 = vld [vmem:[%s1] sm:$0x1]
    %v36 = vperm.slane %v34, 0
    %v38 = vmul.f32 %v32, %v36
    %v39 = vmul.f32 %v33, %v36
    %vm40 = vcmask 261120
    %v41 = vsel %vm40, %v38, 0.0
    %42 = vadd.xlane.f32.xlu0 %v41
    %v43 = vpop.xlane.xlu0 %42
    %v44 = vsel %vm40, %v39, 0.0
    %45 = vadd.xlane.f32.xlu0 %v44
    %v46 = vpop.xlane.xlu0 %45
    %s47 = sld [smem:[#allocation2]]
    %v48 = vstv %s47
    %v49 = vadd.f32 %v43, %v48
    %v50 = vadd.f32 %v46, %v48
    %v53 = vlaneseq
    %v54 = vand.u32 %v53, 127
    %v55 = vperm.slane %v49, %v54
    %v56 = vadd.s32 %v54, 4294967288
    %v57 = vperm.slane %v50, %v56
    %vm58 = vcmask 130112
    %v59 = vsel %vm58, %v57, %v55
    %vm61 = vcmask 122880
    %62 = vst.msk [vmem:[#allocation6] sm:$0x1] %vm61, %v59
    // Predicated region
    $region18: #{tpu_custom_call.1} parent=1 // pred_check
      _
    $region19: #{tpu_custom_call.1} parent=1 // pred_check_branch
      %64 = sbr.rel (0) target = $region21
    $region20: #{tpu_custom_call.1} parent=1 // pred_region
      %66 = vsyncadd [#allocation5], 0
      %s68 = sshll.u32 [#allocation6], 4
      %s69 = int_to_ptr.vmem [resolvable:$true] %s68
      %s70 = sshll.u32 %s3, 4
      %s71 = int_to_ptr.hbm [resolvable:$true] %s70
      %73 = dma.vmem_to_hbm [thread:$0]  %s69, 16, %s71, [#allocation5]
    $region21: #{tpu_custom_call.1} parent=1 // pred_fallthru
      _
    // Predicated region
    $region22: #{tpu_custom_call.1} parent=1 // pred_check
      _
    $region23: #{tpu_custom_call.1} parent=1 // pred_check_branch
      %75 = sbr.rel (0) target = $region25
    $region24: #{tpu_custom_call.1} parent=1 // pred_region
      %77 = dma.done [#allocation5], 16
    $region25: #{tpu_custom_call.1} parent=1 // pred_fallthru
      _
    %78 = vsyncpa [#allocation4], 1
    %79 = vsyncpa [#allocation5], 1

</llo_original>
